<compile_context>
chip_gen: v6e
topology: v6e:2x2x1
jax: 0.10.0
libtpu: 0.0.40
codegen_flags: <defaults>
</compile_context>

<pallas_src>
import functools

import jax
import jax.numpy as jnp
from jax.experimental import pallas as pl
from jax.experimental.pallas import tpu as pltpu


# ---------------------------------------------------------------------------
# Kernel: one grid step = add the two (ts, D) addend slabs on the VPU and
# store the result to tb batch rows of the output tile (the HBM-bound part).
# ---------------------------------------------------------------------------
def _elem_pos_emb_kernel(elem_slab_ref, attr_slab_ref, o_ref):
    emb = elem_slab_ref[...] + attr_slab_ref[...]           # (ts, D) f32 VPU add
    o_ref[...] = jnp.broadcast_to(emb[None], o_ref.shape)   # (tb, ts, D) aligned store


# ---------------------------------------------------------------------------
# Tile selection (VMEM- and megacore-aware)
# ---------------------------------------------------------------------------
def _pick_tiles(B, S, D):
    itemsize = 4  # f32
    # Sequence tile: whole S when small, otherwise a multiple of 8 sized so the
    # per-step working set stays well inside v7x's 32 MiB scoped VMEM.
    max_slab_bytes = 2 << 20
    if S * D * itemsize <= max_slab_bytes:
        ts = S
    else:
        ts = max(8, (max_slab_bytes // (D * itemsize)) // 8 * 8)
        ts = min(ts, max(8, (S // 8) * 8))
    # Batch tile: target ~2 MiB of stores per grid step (amortise ~0.35 us/step
    # overhead), bound the double-buffered output block, and keep >= 2 grid
    # steps when B >= 2 so both v7x TensorCores get work.
    blk_bytes = ts * D * itemsize
    tb = max(1, (2 << 20) // blk_bytes)
    tb = min(tb, max(1, (8 << 20) // (2 * blk_bytes)))
    tb = min(tb, B)
    if B >= 2:
        tb = min(tb, max(1, B // 2))
    return tb, ts


# ---------------------------------------------------------------------------
# Per-config builder (cached) + jit-ted forward
# ---------------------------------------------------------------------------
@functools.lru_cache(maxsize=None)
def _build_forward(B, S, D, n_elem, n_attr, has_bos):
    off = 1 if has_bos else 0
    s_body = S - off
    assert 0 <= s_body <= n_elem * n_attr, "sequence longer than max_token_length"

    tb, ts = _pick_tiles(B, S, D)
    grid = (pl.cdiv(B, tb), pl.cdiv(S, ts))
    itemsize = 4
    vmem_needed = 2 * tb * ts * D * itemsize + 2 * 2 * ts * D * itemsize
    vmem_limit = int(min(32 << 20, max(vmem_needed + (4 << 20), 16 << 20)))

    call = pl.pallas_call(
        _elem_pos_emb_kernel,
        out_shape=jax.ShapeDtypeStruct((B, S, D), jnp.float32),
        grid=grid,
        in_specs=[
            pl.BlockSpec((ts, D), lambda b, s: (s, 0)),   # elem addend slab
            pl.BlockSpec((ts, D), lambda b, s: (s, 0)),   # attr addend slab
        ],
        out_specs=pl.BlockSpec((tb, ts, D), lambda b, s: (b, s, 0)),
        compiler_params=pltpu.CompilerParams(
            dimension_semantics=("parallel", "parallel"),
            vmem_limit_bytes=vmem_limit,
        ),
        cost_estimate=pl.CostEstimate(
            flops=grid[0] * grid[1] * ts * D,
            transcendentals=0,
            bytes_accessed=B * S * D * itemsize + 2 * S * D * itemsize,
        ),
    )

    def _make_slabs(elem_emb, attr_emb, bos_emb):
        # Pure layout plumbing (einops repeat / tile / bos concat), no FLOPs:
        #   elem_slab[r] = elem_emb[r // n_attr],  attr_slab[r] = attr_emb[r % n_attr]
        # with the bos row (if present) carried in elem_slab and a zero row in
        # attr_slab so the in-kernel add reproduces the reference exactly.
        elem_slab = jnp.repeat(elem_emb, n_attr, axis=0)[:s_body]
        attr_slab = jnp.tile(attr_emb, (n_elem, 1))[:s_body]
        if has_bos:
            zero = jnp.zeros((1, D), jnp.float32)
            elem_slab = jnp.concatenate([bos_emb, elem_slab], axis=0)
            attr_slab = jnp.concatenate([zero, attr_slab], axis=0)
        return elem_slab, attr_slab

    if has_bos:
        def forward(bos_emb, elem_emb, attr_emb):
            elem_slab, attr_slab = _make_slabs(elem_emb, attr_emb, bos_emb)
            return call(elem_slab, attr_slab)
    else:
        def forward(elem_emb, attr_emb):
            elem_slab, attr_slab = _make_slabs(elem_emb, attr_emb, None)
            return call(elem_slab, attr_slab)

    return jax.jit(forward)


def element_positional_embedding_forward(params, h):
    """Pallas implementation of ElementPositionalEmbedding.forward.

    `h` is only used for its (B, S) shape, exactly like the PyTorch module
    (it is never read, so it costs zero HBM traffic here).
    Returns (B, S, dim_model) float32, identical across the batch dimension.
    """
    B, S = int(h.shape[0]), int(h.shape[1])
    n_attr = int(params["n_attr_per_elem"])
    n_elem = int(params["n_elem"])
    D = int(params["elem_emb"].shape[1])
    has_bos = "bos_emb" in params
    fwd = _build_forward(B, S, D, n_elem, n_attr, has_bos)
    if has_bos:
        return fwd(params["bos_emb"], params["elem_emb"], params["attr_emb"])
    return fwd(params["elem_emb"], params["attr_emb"])


# ---------------------------------------------------------------------------
# Parameter init (mirrors the PyTorch module's torch.rand parameters)
# ---------------------------------------------------------------------------
def init_element_positional_embedding(key, dim_model, max_token_length,
                                      n_attr_per_elem=5):
    remainder = max_token_length % n_attr_per_elem
    if remainder not in (0, 1):
        raise NotImplementedError
    n_elem = max_token_length // n_attr_per_elem
    k_bos, k_elem, k_attr = jax.random.split(key, 3)
    params = {
        "elem_emb": jax.random.uniform(k_elem, (n_elem, dim_model), jnp.float32),
        "attr_emb": jax.random.uniform(k_attr, (n_attr_per_elem, dim_model),
                                       jnp.float32),
        "n_elem": n_elem,
        "n_attr_per_elem": n_attr_per_elem,
        "max_len": max_token_length,
    }
    if remainder == 1:
        params["bos_emb"] = jax.random.uniform(k_bos, (1, dim_model), jnp.float32)
    return params


# ---------------------------------------------------------------------------
# Pure-JAX reference (straight transcription of the PyTorch forward)
# ---------------------------------------------------------------------------
def reference_forward(params, h):
    n_attr = params["n_attr_per_elem"]
    n_elem = params["n_elem"]
    has_bos = "bos_emb" in params
    if has_bos:
        h = h[:, 1:]
    B, S = h.shape[0], h.shape[1]
    elem = jnp.repeat(params["elem_emb"], n_attr, axis=0)        # 's d -> (s x) d'
    attr = jnp.tile(params["attr_emb"], (n_elem, 1))             # 'x d -> (s x) d'
    emb = (elem + attr)[:S]
    if has_bos:
        emb = jnp.concatenate([params["bos_emb"], emb], axis=0)
    return jnp.broadcast_to(emb[None], (B, emb.shape[0], emb.shape[1]))


# ---------------------------------------------------------------------------
# Main
# ---------------------------------------------------------------------------
if __name__ == "__main__":
    key = jax.random.PRNGKey(0)
    kp1, kh1, kp2, kh2 = jax.random.split(key, 4)

    # Config 1: max_token_length % n_attr_per_elem == 1  ->  bos_emb path.
    dim_model, max_len, n_attr = 32, 16, 5
    params = init_element_positional_embedding(kp1, dim_model, max_len, n_attr)
    B, S = 2, 8
    h = jax.random.normal(kh1, (B, S, dim_model), jnp.float32)   # only (B, S) used
    out = jax.block_until_ready(element_positional_embedding_forward(params, h))
    ref = reference_forward(params, h)
    assert out.shape == (B, S, dim_model)
    assert bool(jnp.all(jnp.isfinite(out)))
    assert bool(jnp.allclose(out, ref, atol=1e-6, rtol=1e-6))

    # Config 2: remainder == 0  ->  no bos_emb, multi-batch tile (tb=2).
    params2 = init_element_positional_embedding(kp2, dim_model, 15, n_attr)
    B2, S2 = 4, 15
    h2 = jax.random.normal(kh2, (B2, S2, dim_model), jnp.float32)
    out2 = jax.block_until_ready(element_positional_embedding_forward(params2, h2))
    ref2 = reference_forward(params2, h2)
    assert out2.shape == (B2, S2, dim_model)
    assert bool(jnp.allclose(out2, ref2, atol=1e-6, rtol=1e-6))

    print("KERNEL_OK")
</pallas_src>

<mosaic_0001>
module attributes {stable_mosaic.version = 11 : i64} {
  func.func @_elem_pos_emb_kernel(%arg0: i32, %arg1: i32, %arg2: memref<8x32xf32, #tpu.memory_space<vmem>>, %arg3: memref<8x32xf32, #tpu.memory_space<vmem>>, %arg4: memref<1x8x32xf32, #tpu.memory_space<vmem>>) attributes {dimension_semantics = [#tpu.dimension_semantics<parallel>, #tpu.dimension_semantics<parallel>], iteration_bounds = array<i64: 2, 1>, scalar_prefetch = 0 : i64, scratch_operands = 0 : i64, tpu.core_type = #tpu.core_type<tc>, window_params = [{transform_indices = @transform_0, window_bounds = array<i64: 8, 32>}, {transform_indices = @transform_1, window_bounds = array<i64: 8, 32>}, {transform_indices = @transform_2, window_bounds = array<i64: 1, 8, 32>}]} {
    %c0 = arith.constant 0 : index
    %c0_0 = arith.constant 0 : index
    %0 = vector.load %arg2[%c0, %c0_0] : memref<8x32xf32, #tpu.memory_space<vmem>>, vector<8x32xf32>
    %c0_1 = arith.constant 0 : index
    %c0_2 = arith.constant 0 : index
    %1 = vector.load %arg3[%c0_1, %c0_2] : memref<8x32xf32, #tpu.memory_space<vmem>>, vector<8x32xf32>
    %2 = arith.addf %0, %1 : vector<8x32xf32>
    %3 = vector.shape_cast %2 : vector<8x32xf32> to vector<1x8x32xf32>
    %c0_3 = arith.constant 0 : index
    %c0_4 = arith.constant 0 : index
    %c0_5 = arith.constant 0 : index
    %4 = vector.load %arg4[%c0_3, %c0_4, %c0_5] : memref<1x8x32xf32, #tpu.memory_space<vmem>>, vector<1x8x32xf32>
    tpu.vector_store %arg4[%c0_3, %c0_4, %c0_5], %3 {strides = array<i32>} : memref<1x8x32xf32, #tpu.memory_space<vmem>>, vector<1x8x32xf32>,
    return
  }
  func.func @transform_0(%arg0: i32, %arg1: i32) -> (i32, i32) {
    %c0_i32 = arith.constant 0 : i32
    %c0_i32_0 = arith.constant 0 : i32
    return %arg1, %c0_i32 : i32, i32
  }
  func.func @transform_1(%arg0: i32, %arg1: i32) -> (i32, i32) {
    %c0_i32 = arith.constant 0 : i32
    %c0_i32_0 = arith.constant 0 : i32
    return %arg1, %c0_i32 : i32, i32
  }
  func.func @transform_2(%arg0: i32, %arg1: i32) -> (i32, i32, i32) {
    %c0_i32 = arith.constant 0 : i32
    %c0_i32_0 = arith.constant 0 : i32
    return %arg0, %arg1, %c0_i32 : i32, i32, i32
  }
}

</mosaic_0001>

<llo_original>
// kernel: forward.1
$region0: #{forward.1}
  #allocation0 [shape = 'u32[]', space=smem, size = 0x4, offset = 0x4, fixed_abs, tag = 'smem constant byte address 0x4 - core index']
  #allocation1 [shape = 'u32[144,128]{1,0:T(1,128)}', space=vmem, size = 0x12000, scoped, tag = 'internal scratch']
  %s0 = inlined_call_operand.vmem [shape: f32[8,32], index: 0, kind: input, shape index: {}]
  %s1 = inlined_call_operand.vmem [shape: f32[8,32], index: 1, kind: input, shape index: {}]
  %s2 = inlined_call_operand.hbm [shape: f32[2,8,32], index: 2, kind: output, shape index: {}]
  %s3 = sld [smem:[#allocation0]]
  $region41: #{forward.1} parent=0
    _
  %s5 = ssub.s32 1, %s3
  %s6 = scalar_select 0, %s5, %s3
  $region1: #{forward.1} parent=0
    #allocation2 [shape = 'u8[8192]{0}', space=vmem, size = 0x2000, scoped, tag = 'output window, operand 0']
    #allocation3 [shape = 's32[2]{0}', space=sflag, size = 0x8, scoped, tag = 'scoped memory for forward.1']
    %7 = vsyncpa [#allocation3], 0
    %s8 = scalar_lea.sflag [#allocation3], 1
    %9 = vsyncpa %s8, 0
    loop: start=0, step=1, limit=4
    $region2: #{forward.1} parent=1 // loop_pre_header
      _
    $region3: #{forward.1} parent=1 // loop_header
      %s11 = sphi 0, %s15
      %p12 = scmp.ge.s32.totalorder %s11, 4
      %s18 = sphi 0, %s30
      %s19 = sphi 0, %s26
      %s20 = sphi 0, %s18
      %s21 = sphi 0, %s19
      %s22 = sphi 0, %s20
      %s23 = sphi 0, %s21
      %s33 = sphi 0, %s35
      %s36 = sphi 0, %s33
      %s37 = sphi 0, %s36
      %s53 = sphi 0, %s37
      %s59 = sphi 0, %s61
      %s62 = sphi 0, %s59
      %s63 = sphi 0, %s62
      %s79 = sphi 0, %s63
      %s87 = sphi 0, %s89
      %s90 = sphi 0, %s87
      %s91 = sphi 0, %s90
      %s107 = sphi 0, %s91
    $region4: #{forward.1} parent=1 // loop_header_branch
      %14 = sbr.rel (%p12) target = $region8
    $region5: #{forward.1} parent=1 // loop_body
      %s16 = ssub.s32 %s11, 1
      %s17 = ssub.s32 %s11, 2
      %s24 = sadd.s32 1, %s19
      %p25 = scmp.ge.s32.totalorder %s24, 1
      %s26 = scalar_select %p25, 0, %s24
      %s27 = sadd.s32 1, %s18
      %s28 = scalar_select %p25, %s27, %s18
      %p29 = scmp.ge.s32.totalorder %s28, 2
      %s30 = scalar_select %p29, 0, %s28
      %s31 = ssub.s32 %s19, %s26
      %p32 = scmp.eq.s32.totalorder %s31, 0
      %s34 = sadd.s32 %s33, 1
      %s35 = scalar_select %p32, %s33, %s34
      %p38 = pneg %p32
      %p39 = scmp.eq.s32.totalorder %s11, 1
      %p40 = por %p38, %p39
      %p41 = scmp.ne.s32.totalorder %s33, %s36
      %p42 = scmp.eq.s32.totalorder %s11, 0
      %p43 = por %p41, %p42
      %p44 = scmp.ne.s32.totalorder %s33, %s36
      %p45 = scmp.eq.s32.totalorder %s16, 1
      %p46 = por %p44, %p45
      %p47 = scmp.ne.s32.totalorder %s36, %s37
      %p48 = scmp.eq.s32.totalorder %s16, 0
      %p49 = por %p47, %p48
      %p50 = scmp.ne.s32.totalorder %s36, %s37
      %p51 = scmp.eq.s32.totalorder %s17, 1
      %p52 = por %p50, %p51
      %p54 = scmp.ne.s32.totalorder %s37, %s53
      %p55 = scmp.eq.s32.totalorder %s17, 0
      %p56 = por %p54, %p55
      %s57 = ssub.s32 %s19, %s26
      %p58 = scmp.eq.s32.totalorder %s57, 0
      %s60 = sadd.s32 %s59, 1
      %s61 = scalar_select %p58, %s59, %s60
      %p64 = pneg %p58
      %p65 = scmp.eq.s32.totalorder %s11, 1
      %p66 = por %p64, %p65
      %p67 = scmp.ne.s32.totalorder %s59, %s62
      %p68 = scmp.eq.s32.totalorder %s11, 0
      %p69 = por %p67, %p68
      %p70 = scmp.ne.s32.totalorder %s59, %s62
      %p71 = scmp.eq.s32.totalorder %s16, 1
      %p72 = por %p70, %p71
      %p73 = scmp.ne.s32.totalorder %s62, %s63
      %p74 = scmp.eq.s32.totalorder %s16, 0
      %p75 = por %p73, %p74
      %p76 = scmp.ne.s32.totalorder %s62, %s63
      %p77 = scmp.eq.s32.totalorder %s17, 1
      %p78 = por %p76, %p77
      %p80 = scmp.ne.s32.totalorder %s63, %s79
      %p81 = scmp.eq.s32.totalorder %s17, 0
      %p82 = por %p80, %p81
      %s83 = ssub.s32 %s18, %s30
      %s84 = ssub.s32 %s19, %s26
      %s85 = sor.u32 %s83, %s84
      %p86 = scmp.eq.s32.totalorder %s85, 0
      %s88 = sadd.s32 %s87, 1
      %s89 = scalar_select %p86, %s87, %s88
      %p92 = pneg %p86
      %p93 = scmp.eq.s32.totalorder %s11, 1
      %p94 = por %p92, %p93
      %p95 = scmp.ne.s32.totalorder %s87, %s90
      %p96 = scmp.eq.s32.totalorder %s11, 0
      %p97 = por %p95, %p96
      %p98 = scmp.ne.s32.totalorder %s87, %s90
      %p99 = scmp.eq.s32.totalorder %s16, 1
      %p100 = por %p98, %p99
      %p101 = scmp.ne.s32.totalorder %s90, %s91
      %p102 = scmp.eq.s32.totalorder %s16, 0
      %p103 = por %p101, %p102
      %p104 = scmp.ne.s32.totalorder %s90, %s91
      %p105 = scmp.eq.s32.totalorder %s17, 1
      %p106 = por %p104, %p105
      %p108 = scmp.ne.s32.totalorder %s91, %s107
      %p109 = scmp.eq.s32.totalorder %s17, 0
      %p110 = por %p108, %p109
      %p111 = scmp.le.s32.totalorder 1, %s11
      %p112 = scmp.lt.s32.totalorder %s11, 3
      %p113 = pnand %p111, %p112
      %p114 = pneg %p113
      // Predicated region
      $region9: #{forward.1} parent=5 // pred_check
        _
      $region10: #{forward.1} parent=5 // pred_check_branch
        %116 = sbr.rel (%p113) target = $region12
      $region11: #{forward.1} parent=5 // pred_region
        %s117 = ssub.s32 %s11, 1
        // Predicated region
        $region13: #{forward.1} parent=11 // pred_check
          %p118 = pneg %p49
        $region14: #{forward.1} parent=11 // pred_check_branch
          %120 = sbr.rel (%p118) target = $region16
        $region15: #{forward.1} parent=11 // pred_region
          %p121 = scmp.lt.s32.totalorder %s21, 0
          %s122 = scalar_select %p121, %s21, 0
          %s123 = smul.addr %s122, 8
          %s124 = scalar_lea.vmem %s0, %s123
        $region16: #{forward.1} parent=11 // pred_fallthru
          _
        // Predicated region
        $region17: #{forward.1} parent=11 // pred_check
          %p125 = pneg %p75
        $region18: #{forward.1} parent=11 // pred_check_branch
          %127 = sbr.rel (%p125) target = $region20
        $region19: #{forward.1} parent=11 // pred_region
          %p128 = scmp.lt.s32.totalorder %s21, 0
          %s129 = scalar_select %p128, %s21, 0
          %s130 = smul.addr %s129, 8
          %s131 = scalar_lea.vmem %s1, %s130
        $region20: #{forward.1} parent=11 // pred_fallthru
          _
      $region12: #{forward.1} parent=5 // pred_fallthru
        _
      %p132 = scmp.lt.s32.totalorder %s11, 2
      // Predicated region
      $region21: #{forward.1} parent=5 // pred_check
        %p133 = pneg %p132
      $region22: #{forward.1} parent=5 // pred_check_branch
        %135 = sbr.rel (%p133) target = $region24
      $region23: #{forward.1} parent=5 // pred_region
        _
      $region24: #{forward.1} parent=5 // pred_fallthru
        _
      %p136 = scmp.le.s32.totalorder 1, %s11
      %p137 = scmp.lt.s32.totalorder %s11, 3
      %p138 = pnand %p136, %p137
      %p139 = pneg %p138
      // Predicated region
      $region25: #{forward.1} parent=5 // pred_check
        _
      $region26: #{forward.1} parent=5 // pred_check_branch
        %141 = sbr.rel (%p138) target = $region28
      $region27: #{forward.1} parent=5 // pred_region
        %s142 = ssub.s32 %s11, 1
        %p143 = scmp.lt.s32.totalorder %s21, 0
        %s144 = scalar_select %p143, %s21, 0
        %s145 = smul.addr %s144, 8
        %s146 = scalar_lea.vmem %s0, %s145
        %p147 = pneg %p49
        %p148 = pneg %p46
        %p149 = scmp.lt.s32.totalorder %s21, 0
        %s150 = scalar_select %p149, %s21, 0
        %s151 = smul.addr %s150, 8
        %s152 = scalar_lea.vmem %s1, %s151
        %p153 = pneg %p75
        %p154 = pneg %p72
        %p155 = pneg %p103
        %p156 = pneg %p100
        %s157 = sand.u32 %s90, 1
        %s158 = scalar_lea.sflag [#allocation3], %s157
        %s159 = sand.u32 %s90, 1
        %s160 = smul.addr %s159, 8
        %s161 = scalar_lea.vmem [#allocation2], %s160
        %p162 = scmp.lt.s32.totalorder %s21, 0
        %s163 = scalar_select %p162, %s21, 0
        %s164 = smul.addr %s163, 8
        %s165 = scalar_lea.vmem %s0, %s164
        %p166 = scmp.lt.s32.totalorder %s21, 0
        %s167 = scalar_select %p166, %s21, 0
        %s168 = smul.addr %s167, 8
        %s169 = scalar_lea.vmem %s1, %s168
        %v170 = vld [vmem:[%s165] sm:$0xff]
        %v171 = vld [vmem:[%s169] sm:$0xff]
        %v172 = vadd.f32 %v170, %v171
        %vm173 = vcmask 261120
        %174 = vst.msk [vmem:[%s161] sm:$0xff] %vm173, %v172
        %s175 = sand.u32 %s90, 1
        %s176 = scalar_lea.sflag [#allocation3], %s175
        %s177 = sand.u32 %s90, 1
        %s178 = smul.addr %s177, 8
        %s179 = scalar_lea.vmem [#allocation2], %s178
        // Predicated region
        $region29: #{forward.1} parent=27 // pred_check
          %p180 = pneg %p100
        $region30: #{forward.1} parent=27 // pred_check_branch
          %182 = sbr.rel (%p180) target = $region32
        $region31: #{forward.1} parent=27 // pred_region
          %s184 = ssub.s32 128, 128
          %185 = vsyncadd %s176, %s184
          %s186 = sadd.s32 %s21, %s20
          %s187 = smul.addr %s186, 128
          %s188 = scalar_lea.hbm %s2, %s187
          %s190 = sshll.u32 %s179, 4
          %s191 = int_to_ptr.vmem [resolvable:$true] %s190
          %193 = dma.vmem_to_hbm [thread:$0]  %s191, 128, %s188, %s176
        $region32: #{forward.1} parent=27 // pred_fallthru
          _
      $region28: #{forward.1} parent=5 // pred_fallthru
        _
      %p194 = scmp.le.s32.totalorder 2, %s11
      // Predicated region
      $region33: #{forward.1} parent=5 // pred_check
        %p195 = pneg %p194
      $region34: #{forward.1} parent=5 // pred_check_branch
        %197 = sbr.rel (%p195) target = $region36
      $region35: #{forward.1} parent=5 // pred_region
        %s198 = ssub.s32 %s11, 2
        // Predicated region
        $region37: #{forward.1} parent=35 // pred_check
          %p199 = pneg %p106
        $region38: #{forward.1} parent=35 // pred_check_branch
          %201 = sbr.rel (%p199) target = $region40
        $region39: #{forward.1} parent=35 // pred_region
          %s202 = sand.u32 %s91, 1
          %s203 = scalar_lea.sflag [#allocation3], %s202
          %s204 = sand.u32 %s91, 1
          %s205 = smul.addr %s204, 8
          %s206 = scalar_lea.vmem [#allocation2], %s205
          %207 = dma.done %s203, 128
        $region40: #{forward.1} parent=35 // pred_fallthru
          _
      $region36: #{forward.1} parent=5 // pred_fallthru
        _
    $region6: #{forward.1} parent=1 // loop_footer
      %s15 = sadd.s32 1, %s11
    $region7: #{forward.1} parent=1 // loop_footer_branch
      %10 = sbr.rel target = $region3
    $region8: #{forward.1} parent=1 // loop_exit
      _
    %208 = vsyncpa [#allocation3], 1
    %s209 = scalar_lea.sflag [#allocation3], 1
    %210 = vsyncpa %s209, 1

</llo_original>
